<compile_context>
chip_gen: v5e
topology: v5e:2x2
jax: 0.10.0
libtpu: 0.0.40
codegen_flags: <defaults>
</compile_context>

<pallas_src>
import functools

import jax
import jax.numpy as jnp
from jax.experimental import pallas as pl
from jax.experimental.pallas import tpu as pltpu


def _newblock_kernel(x_ref, m_ref, w1_ref, b1_ref, w2_ref, b2_ref, out_ref,
                     *, H, W, K, P, Nb):
    """Processes Nb batch images per grid step.

    x_ref:  (Nb, Cin, H*W)        lane-dense input (flattened spatial in lanes)
    m_ref:  (K*K, H*W)            per-tap validity masks (1 inside, 0 at halo)
    w1_ref: (Cmid, K*K*Cin)       conv1 im2col weights, BN1 scale folded in
    b1_ref: (Cmid, 1)             folded BN1 bias
    w2_ref: (Cin, K*K*Cmid)       conv2 im2col weights, BN2 scale folded in
    b2_ref: (Cin, 1)              folded BN2 bias
    out_ref:(Nb, Cin, H*W)        lane-dense output
    """
    HW = H * W
    slope = jnp.float32(0.01)              # nn.LeakyReLU default negative_slope

    masks = m_ref[...]                     # (K*K, HW), revisited (no re-DMA)
    w1 = w1_ref[...]
    w2 = w2_ref[...]
    b1 = b1_ref[...]
    b2 = b2_ref[...]

    def conv(inp, w_stack):
        # inp: (C_in, HW); w_stack: (C_out, K*K*C_in).
        # Build the im2col operand: 9 rolled+masked slabs stacked on sublanes.
        slabs = []
        for ky in range(K):
            for kx in range(K):
                t = ky * K + kx
                s = (ky - P) * W + (kx - P)           # signed flat shift
                if ky == P and kx == P:
                    slabs.append(inp)                 # centre tap: mask == 1
                else:
                    # circular lane roll (XLU); wrapped positions are exactly
                    # the ones the mask zeroes -> equivalent to zero padding.
                    rolled = pltpu.roll(inp, (-s) % HW, 1)
                    slabs.append(rolled * masks[t:t + 1, :])
        stacked = jnp.concatenate(slabs, axis=0)      # (K*K*C_in, HW)
        # Single MXU matmul per conv; accumulation happens inside the MXU.
        return jnp.dot(w_stack, stacked, preferred_element_type=jnp.float32)

    for b in range(Nb):                               # static, small
        x = x_ref[b]                                  # (Cin, HW)

        # ---- layer1: conv(C -> C/2) + folded BN + LeakyReLU ----
        y1 = conv(x, w1) + b1
        y1 = jnp.maximum(y1, slope * y1)

        # ---- layer2: conv(C/2 -> C) + folded BN + LeakyReLU ----
        y2 = conv(y1, w2) + b2
        y2 = jnp.maximum(y2, slope * y2)

        # ---- residual add (lane-dense store) ----
        out_ref[b] = y2 + x


def new_block_forward(x_nchw, params, *, kernel_size=3, padding=1, stride=1,
                      images_per_step=1):
    """NewBlock forward. x_nchw: (N, C, H, W) float32."""
    assert stride == 1, "residual add requires stride == 1"
    N, C, H, W = x_nchw.shape
    assert C % 2 == 0
    Cmid = C // 2
    K, P = kernel_size, padding
    HW = H * W
    Nb = images_per_step
    assert N % Nb == 0, "images_per_step must divide the batch"

    w1, s1, b1, w2, s2, b2 = params        # conv weights in HWIO layout

    def stack_fold(w, scale):
        # w: (K, K, Cin, Cout) HWIO; scale: (Cout, 1).
        # Fold BN scale into the weights and stack taps into the contraction
        # dim: (Cout, K*K*Cin), contraction index = (ky*K+kx)*Cin + ci.
        kk, _, cin, cout = w.shape
        w = w * scale.reshape(1, 1, 1, cout)
        return jnp.transpose(w, (3, 0, 1, 2)).reshape(cout, kk * kk * cin)

    w1s = stack_fold(w1, s1)               # (Cmid, K*K*C)
    w2s = stack_fold(w2, s2)               # (C,    K*K*Cmid)

    # Per-tap validity masks over the flattened spatial axis (shared by both
    # convs: same spatial size, kernel and padding).
    hh, ww = jnp.meshgrid(jnp.arange(H), jnp.arange(W), indexing="ij")
    rows = []
    for ky in range(K):
        for kx in range(K):
            dy, dx = ky - P, kx - P
            ok = ((hh + dy >= 0) & (hh + dy < H) &
                  (ww + dx >= 0) & (ww + dx < W))
            rows.append(ok.reshape(-1))
    masks = jnp.stack(rows).astype(jnp.float32)          # (K*K, HW)

    # Free, contiguous reshape: keep native NCHW order, no transpose, no pad.
    x_flat = x_nchw.reshape(N, C, HW).astype(jnp.float32)

    kernel = functools.partial(_newblock_kernel, H=H, W=W, K=K, P=P, Nb=Nb)

    # VMEM budget derived from the actual block sizes (x2 for double
    # buffering) plus an estimate for the in-kernel im2col/activation values,
    # clamped to 48 MiB so it stays safe on v7x's 64 MiB physical VMEM.
    block_bytes = 4 * (Nb * C * HW            # x block
                       + K * K * HW            # masks
                       + Cmid * K * K * C + Cmid
                       + C * K * K * Cmid + C
                       + Nb * C * HW)          # out block
    scratch_est = 4 * (2 * K * K * C * HW + 4 * C * HW)
    vmem_limit = int(min(max(2 * block_bytes + scratch_est + (4 << 20),
                             16 << 20), 48 << 20))

    out_flat = pl.pallas_call(
        kernel,
        out_shape=jax.ShapeDtypeStruct((N, C, HW), jnp.float32),
        grid_spec=pltpu.PrefetchScalarGridSpec(
            num_scalar_prefetch=0,
            grid=(N // Nb,),
            in_specs=[
                pl.BlockSpec((Nb, C, HW), lambda n: (n, 0, 0)),
                pl.BlockSpec((K * K, HW), lambda n: (0, 0)),
                pl.BlockSpec((Cmid, K * K * C), lambda n: (0, 0)),
                pl.BlockSpec((Cmid, 1), lambda n: (0, 0)),
                pl.BlockSpec((C, K * K * Cmid), lambda n: (0, 0)),
                pl.BlockSpec((C, 1), lambda n: (0, 0)),
            ],
            out_specs=pl.BlockSpec((Nb, C, HW), lambda n: (n, 0, 0)),
        ),
        compiler_params=pltpu.CompilerParams(
            dimension_semantics=("parallel",),
            vmem_limit_bytes=vmem_limit),
    )(x_flat, masks, w1s, b1, w2s, b2)

    return out_flat.reshape(N, C, H, W)


def init_params(key, in_channels, kernel_size=3, eps=1e-5):
    """Deterministic synthetic parameters for conv + folded eval-mode BN."""
    C = in_channels
    Cmid = C // 2
    ks = jax.random.split(key, 10)

    def bn_fold(kg, kb, km, kv, c):
        gamma = 1.0 + 0.1 * jax.random.normal(kg, (c,), jnp.float32)
        beta = 0.1 * jax.random.normal(kb, (c,), jnp.float32)
        mean = 0.1 * jax.random.normal(km, (c,), jnp.float32)
        var = jnp.abs(jax.random.normal(kv, (c,), jnp.float32)) + 0.5
        scale = gamma / jnp.sqrt(var + eps)
        bias = beta - mean * scale
        return scale.reshape(c, 1), bias.reshape(c, 1)

    # conv weights in HWIO layout (k, k, in, out)
    w1 = 0.1 * jax.random.normal(ks[0], (kernel_size, kernel_size, C, Cmid),
                                 jnp.float32)
    w2 = 0.1 * jax.random.normal(ks[1], (kernel_size, kernel_size, Cmid, C),
                                 jnp.float32)
    s1, b1 = bn_fold(ks[2], ks[3], ks[4], ks[5], Cmid)
    s2, b2 = bn_fold(ks[6], ks[7], ks[8], ks[9], C)
    return (w1, s1, b1, w2, s2, b2)


def _reference_forward(x_nchw, params, *, kernel_size=3, padding=1):
    """Pure-JAX reference (lax conv) for correctness checking."""
    w1, s1, b1, w2, s2, b2 = params
    x = jnp.transpose(x_nchw, (0, 2, 3, 1))

    def conv_bn_lrelu(y, w, s, b):
        y = jax.lax.conv_general_dilated(
            y, w, window_strides=(1, 1),
            padding=[(padding, padding), (padding, padding)],
            dimension_numbers=("NHWC", "HWIO", "NHWC"))
        y = y * s.reshape(1, 1, 1, -1) + b.reshape(1, 1, 1, -1)
        return jnp.where(y > 0, y, 0.01 * y)

    out = conv_bn_lrelu(x, w1, s1, b1)
    out = conv_bn_lrelu(out, w2, s2, b2)
    out = out + x
    return jnp.transpose(out, (0, 3, 1, 2))


if __name__ == "__main__":
    key = jax.random.PRNGKey(0)
    k_x, k_p = jax.random.split(key)

    N, C, H, W = 2, 4, 16, 16   # small shapes; in_channels=4 -> reduced=2
    x = jax.random.normal(k_x, (N, C, H, W), jnp.float32)
    params = init_params(k_p, C, kernel_size=3)

    out = new_block_forward(x, params, kernel_size=3, padding=1, stride=1,
                            images_per_step=1)
    out = jax.block_until_ready(out)

    ref = _reference_forward(x, params, kernel_size=3, padding=1)
    assert out.shape == (N, C, H, W)
    err = float(jnp.max(jnp.abs(out - ref)))
    assert jnp.allclose(out, ref, atol=1e-4, rtol=1e-4), err

    print("KERNEL_OK")
</pallas_src>

<mosaic_0001>
module attributes {stable_mosaic.version = 11 : i64} {
  func.func @_newblock_kernel(%arg0: i32, %arg1: memref<1x4x256xf32, #tpu.memory_space<vmem>>, %arg2: memref<9x256xf32, #tpu.memory_space<vmem>>, %arg3: memref<2x36xf32, #tpu.memory_space<vmem>>, %arg4: memref<2x1xf32, #tpu.memory_space<vmem>>, %arg5: memref<4x18xf32, #tpu.memory_space<vmem>>, %arg6: memref<4x1xf32, #tpu.memory_space<vmem>>, %arg7: memref<1x4x256xf32, #tpu.memory_space<vmem>>) attributes {dimension_semantics = [#tpu.dimension_semantics<parallel>], iteration_bounds = array<i64: 2>, scalar_prefetch = 0 : i64, scratch_operands = 0 : i64, tpu.core_type = #tpu.core_type<tc>, window_params = [{transform_indices = @transform_0, window_bounds = array<i64: 1, 4, 256>}, {pipeline_mode = #tpu.pipeline_mode<synchronous>, transform_indices = @transform_1, window_bounds = array<i64: 9, 256>}, {pipeline_mode = #tpu.pipeline_mode<synchronous>, transform_indices = @transform_2, window_bounds = array<i64: 2, 36>}, {pipeline_mode = #tpu.pipeline_mode<synchronous>, transform_indices = @transform_3, window_bounds = array<i64: 2, 1>}, {pipeline_mode = #tpu.pipeline_mode<synchronous>, transform_indices = @transform_4, window_bounds = array<i64: 4, 18>}, {pipeline_mode = #tpu.pipeline_mode<synchronous>, transform_indices = @transform_5, window_bounds = array<i64: 4, 1>}, {transform_indices = @transform_6, window_bounds = array<i64: 1, 4, 256>}]} {
    %c0 = arith.constant 0 : index
    %c0_0 = arith.constant 0 : index
    %0 = vector.load %arg2[%c0, %c0_0] : memref<9x256xf32, #tpu.memory_space<vmem>>, vector<9x256xf32>
    %c0_1 = arith.constant 0 : index
    %c0_2 = arith.constant 0 : index
    %1 = vector.load %arg3[%c0_1, %c0_2] : memref<2x36xf32, #tpu.memory_space<vmem>>, vector<2x36xf32>
    %c0_3 = arith.constant 0 : index
    %c0_4 = arith.constant 0 : index
    %2 = vector.load %arg5[%c0_3, %c0_4] : memref<4x18xf32, #tpu.memory_space<vmem>>, vector<4x18xf32>
    %c0_5 = arith.constant 0 : index
    %c0_6 = arith.constant 0 : index
    %3 = vector.load %arg4[%c0_5, %c0_6] : memref<2x1xf32, #tpu.memory_space<vmem>>, vector<2x1xf32>
    %c0_7 = arith.constant 0 : index
    %c0_8 = arith.constant 0 : index
    %4 = vector.load %arg6[%c0_7, %c0_8] : memref<4x1xf32, #tpu.memory_space<vmem>>, vector<4x1xf32>
    %c0_9 = arith.constant 0 : index
    %c0_10 = arith.constant 0 : index
    %c0_11 = arith.constant 0 : index
    %5 = vector.load %arg1[%c0_9, %c0_10, %c0_11] : memref<1x4x256xf32, #tpu.memory_space<vmem>>, vector<1x4x256xf32>
    %6 = vector.shape_cast %5 : vector<1x4x256xf32> to vector<4x256xf32>
    %c17_i32 = arith.constant 17 : i32
    %7 = tpu.dynamic_rotate %6 by %c17_i32 dim 1 : vector<4x256xf32>, i32 -> vector<4x256xf32>
    %8 = vector.extract_strided_slice %0 {offsets = [0, 0], sizes = [1, 256], strides = [1, 1]} : vector<9x256xf32> to vector<1x256xf32>
    %9 = vector.broadcast %8 : vector<1x256xf32> to vector<4x256xf32>
    %10 = arith.mulf %7, %9 : vector<4x256xf32>
    %c16_i32 = arith.constant 16 : i32
    %11 = tpu.dynamic_rotate %6 by %c16_i32 dim 1 : vector<4x256xf32>, i32 -> vector<4x256xf32>
    %12 = vector.extract_strided_slice %0 {offsets = [1, 0], sizes = [1, 256], strides = [1, 1]} : vector<9x256xf32> to vector<1x256xf32>
    %13 = vector.broadcast %12 : vector<1x256xf32> to vector<4x256xf32>
    %14 = arith.mulf %11, %13 : vector<4x256xf32>
    %c15_i32 = arith.constant 15 : i32
    %15 = tpu.dynamic_rotate %6 by %c15_i32 dim 1 : vector<4x256xf32>, i32 -> vector<4x256xf32>
    %16 = vector.extract_strided_slice %0 {offsets = [2, 0], sizes = [1, 256], strides = [1, 1]} : vector<9x256xf32> to vector<1x256xf32>
    %17 = vector.broadcast %16 : vector<1x256xf32> to vector<4x256xf32>
    %18 = arith.mulf %15, %17 : vector<4x256xf32>
    %c1_i32 = arith.constant 1 : i32
    %19 = tpu.dynamic_rotate %6 by %c1_i32 dim 1 : vector<4x256xf32>, i32 -> vector<4x256xf32>
    %20 = vector.extract_strided_slice %0 {offsets = [3, 0], sizes = [1, 256], strides = [1, 1]} : vector<9x256xf32> to vector<1x256xf32>
    %21 = vector.broadcast %20 : vector<1x256xf32> to vector<4x256xf32>
    %22 = arith.mulf %19, %21 : vector<4x256xf32>
    %c255_i32 = arith.constant 255 : i32
    %23 = tpu.dynamic_rotate %6 by %c255_i32 dim 1 : vector<4x256xf32>, i32 -> vector<4x256xf32>
    %24 = vector.extract_strided_slice %0 {offsets = [5, 0], sizes = [1, 256], strides = [1, 1]} : vector<9x256xf32> to vector<1x256xf32>
    %25 = vector.broadcast %24 : vector<1x256xf32> to vector<4x256xf32>
    %26 = arith.mulf %23, %25 : vector<4x256xf32>
    %c241_i32 = arith.constant 241 : i32
    %27 = tpu.dynamic_rotate %6 by %c241_i32 dim 1 : vector<4x256xf32>, i32 -> vector<4x256xf32>
    %28 = vector.extract_strided_slice %0 {offsets = [6, 0], sizes = [1, 256], strides = [1, 1]} : vector<9x256xf32> to vector<1x256xf32>
    %29 = vector.broadcast %28 : vector<1x256xf32> to vector<4x256xf32>
    %30 = arith.mulf %27, %29 : vector<4x256xf32>
    %c240_i32 = arith.constant 240 : i32
    %31 = tpu.dynamic_rotate %6 by %c240_i32 dim 1 : vector<4x256xf32>, i32 -> vector<4x256xf32>
    %32 = vector.extract_strided_slice %0 {offsets = [7, 0], sizes = [1, 256], strides = [1, 1]} : vector<9x256xf32> to vector<1x256xf32>
    %33 = vector.broadcast %32 : vector<1x256xf32> to vector<4x256xf32>
    %34 = arith.mulf %31, %33 : vector<4x256xf32>
    %c239_i32 = arith.constant 239 : i32
    %35 = tpu.dynamic_rotate %6 by %c239_i32 dim 1 : vector<4x256xf32>, i32 -> vector<4x256xf32>
    %36 = vector.extract_strided_slice %0 {offsets = [8, 0], sizes = [1, 256], strides = [1, 1]} : vector<9x256xf32> to vector<1x256xf32>
    %37 = vector.broadcast %36 : vector<1x256xf32> to vector<4x256xf32>
    %38 = arith.mulf %35, %37 : vector<4x256xf32>
    %39 = tpu.concatenate %10, %14, %18, %22, %6, %26, %30, %34, %38 in 0 : vector<4x256xf32>, vector<4x256xf32>, vector<4x256xf32>, vector<4x256xf32>, vector<4x256xf32>, vector<4x256xf32>, vector<4x256xf32>, vector<4x256xf32>, vector<4x256xf32> -> vector<36x256xf32>
    %cst = arith.constant dense<0.000000e+00> : vector<2x256xf32>
    %40 = tpu.matmul %1, %39, %cst {dimension_numbers = #tpu.dot_dimension_numbers<[1], [0], [0], [1], [0, 0, 1, 1], [], []>} : vector<2x36xf32>, vector<36x256xf32>, vector<2x256xf32> -> vector<2x256xf32>
    %41 = vector.broadcast %3 : vector<2x1xf32> to vector<2x256xf32>
    %42 = arith.addf %40, %41 : vector<2x256xf32>
    %cst_12 = arith.constant 0.00999999977 : f32
    %43 = vector.broadcast %cst_12 : f32 to vector<2x256xf32>
    %44 = arith.mulf %43, %42 : vector<2x256xf32>
    %45 = arith.maximumf %42, %44 : vector<2x256xf32>
    %c17_i32_13 = arith.constant 17 : i32
    %46 = tpu.dynamic_rotate %45 by %c17_i32_13 dim 1 : vector<2x256xf32>, i32 -> vector<2x256xf32>
    %47 = vector.extract_strided_slice %0 {offsets = [0, 0], sizes = [1, 256], strides = [1, 1]} : vector<9x256xf32> to vector<1x256xf32>
    %48 = vector.broadcast %47 : vector<1x256xf32> to vector<2x256xf32>
    %49 = arith.mulf %46, %48 : vector<2x256xf32>
    %c16_i32_14 = arith.constant 16 : i32
    %50 = tpu.dynamic_rotate %45 by %c16_i32_14 dim 1 : vector<2x256xf32>, i32 -> vector<2x256xf32>
    %51 = vector.extract_strided_slice %0 {offsets = [1, 0], sizes = [1, 256], strides = [1, 1]} : vector<9x256xf32> to vector<1x256xf32>
    %52 = vector.broadcast %51 : vector<1x256xf32> to vector<2x256xf32>
    %53 = arith.mulf %50, %52 : vector<2x256xf32>
    %c15_i32_15 = arith.constant 15 : i32
    %54 = tpu.dynamic_rotate %45 by %c15_i32_15 dim 1 : vector<2x256xf32>, i32 -> vector<2x256xf32>
    %55 = vector.extract_strided_slice %0 {offsets = [2, 0], sizes = [1, 256], strides = [1, 1]} : vector<9x256xf32> to vector<1x256xf32>
    %56 = vector.broadcast %55 : vector<1x256xf32> to vector<2x256xf32>
    %57 = arith.mulf %54, %56 : vector<2x256xf32>
    %c1_i32_16 = arith.constant 1 : i32
    %58 = tpu.dynamic_rotate %45 by %c1_i32_16 dim 1 : vector<2x256xf32>, i32 -> vector<2x256xf32>
    %59 = vector.extract_strided_slice %0 {offsets = [3, 0], sizes = [1, 256], strides = [1, 1]} : vector<9x256xf32> to vector<1x256xf32>
    %60 = vector.broadcast %59 : vector<1x256xf32> to vector<2x256xf32>
    %61 = arith.mulf %58, %60 : vector<2x256xf32>
    %c255_i32_17 = arith.constant 255 : i32
    %62 = tpu.dynamic_rotate %45 by %c255_i32_17 dim 1 : vector<2x256xf32>, i32 -> vector<2x256xf32>
    %63 = vector.extract_strided_slice %0 {offsets = [5, 0], sizes = [1, 256], strides = [1, 1]} : vector<9x256xf32> to vector<1x256xf32>
    %64 = vector.broadcast %63 : vector<1x256xf32> to vector<2x256xf32>
    %65 = arith.mulf %62, %64 : vector<2x256xf32>
    %c241_i32_18 = arith.constant 241 : i32
    %66 = tpu.dynamic_rotate %45 by %c241_i32_18 dim 1 : vector<2x256xf32>, i32 -> vector<2x256xf32>
    %67 = vector.extract_strided_slice %0 {offsets = [6, 0], sizes = [1, 256], strides = [1, 1]} : vector<9x256xf32> to vector<1x256xf32>
    %68 = vector.broadcast %67 : vector<1x256xf32> to vector<2x256xf32>
    %69 = arith.mulf %66, %68 : vector<2x256xf32>
    %c240_i32_19 = arith.constant 240 : i32
    %70 = tpu.dynamic_rotate %45 by %c240_i32_19 dim 1 : vector<2x256xf32>, i32 -> vector<2x256xf32>
    %71 = vector.extract_strided_slice %0 {offsets = [7, 0], sizes = [1, 256], strides = [1, 1]} : vector<9x256xf32> to vector<1x256xf32>
    %72 = vector.broadcast %71 : vector<1x256xf32> to vector<2x256xf32>
    %73 = arith.mulf %70, %72 : vector<2x256xf32>
    %c239_i32_20 = arith.constant 239 : i32
    %74 = tpu.dynamic_rotate %45 by %c239_i32_20 dim 1 : vector<2x256xf32>, i32 -> vector<2x256xf32>
    %75 = vector.extract_strided_slice %0 {offsets = [8, 0], sizes = [1, 256], strides = [1, 1]} : vector<9x256xf32> to vector<1x256xf32>
    %76 = vector.broadcast %75 : vector<1x256xf32> to vector<2x256xf32>
    %77 = arith.mulf %74, %76 : vector<2x256xf32>
    %78 = tpu.concatenate %49, %53, %57, %61, %45, %65, %69, %73, %77 in 0 : vector<2x256xf32>, vector<2x256xf32>, vector<2x256xf32>, vector<2x256xf32>, vector<2x256xf32>, vector<2x256xf32>, vector<2x256xf32>, vector<2x256xf32>, vector<2x256xf32> -> vector<18x256xf32>
    %cst_21 = arith.constant dense<0.000000e+00> : vector<4x256xf32>
    %79 = tpu.matmul %2, %78, %cst_21 {dimension_numbers = #tpu.dot_dimension_numbers<[1], [0], [0], [1], [0, 0, 1, 1], [], []>} : vector<4x18xf32>, vector<18x256xf32>, vector<4x256xf32> -> vector<4x256xf32>
    %80 = vector.broadcast %4 : vector<4x1xf32> to vector<4x256xf32>
    %81 = arith.addf %79, %80 : vector<4x256xf32>
    %cst_22 = arith.constant 0.00999999977 : f32
    %82 = vector.broadcast %cst_22 : f32 to vector<4x256xf32>
    %83 = arith.mulf %82, %81 : vector<4x256xf32>
    %84 = arith.maximumf %81, %83 : vector<4x256xf32>
    %85 = arith.addf %84, %6 : vector<4x256xf32>
    %c0_23 = arith.constant 0 : index
    %c0_24 = arith.constant 0 : index
    %c0_25 = arith.constant 0 : index
    %86 = vector.load %arg7[%c0_23, %c0_24, %c0_25] : memref<1x4x256xf32, #tpu.memory_space<vmem>>, vector<1x4x256xf32>
    %87 = vector.shape_cast %86 : vector<1x4x256xf32> to vector<4x256xf32>
    %88 = vector.shape_cast %85 : vector<4x256xf32> to vector<1x4x256xf32>
    tpu.vector_store %arg7[%c0_23, %c0_24, %c0_25], %88 {strides = array<i32>} : memref<1x4x256xf32, #tpu.memory_space<vmem>>, vector<1x4x256xf32>,
    return
  }
  func.func @transform_0(%arg0: i32) -> (i32, i32, i32) {
    %c0_i32 = arith.constant 0 : i32
    %c0_i32_0 = arith.constant 0 : i32
    %c0_i32_1 = arith.constant 0 : i32
    return %arg0, %c0_i32, %c0_i32_0 : i32, i32, i32
  }
  func.func @transform_1(%arg0: i32) -> (i32, i32) {
    %c0_i32 = arith.constant 0 : i32
    %c0_i32_0 = arith.constant 0 : i32
    %c0_i32_1 = arith.constant 0 : i32
    return %c0_i32, %c0_i32_0 : i32, i32
  }
  func.func @transform_2(%arg0: i32) -> (i32, i32) {
    %c0_i32 = arith.constant 0 : i32
    %c0_i32_0 = arith.constant 0 : i32
    %c0_i32_1 = arith.constant 0 : i32
    return %c0_i32, %c0_i32_0 : i32, i32
  }
  func.func @transform_3(%arg0: i32) -> (i32, i32) {
    %c0_i32 = arith.constant 0 : i32
    %c0_i32_0 = arith.constant 0 : i32
    %c0_i32_1 = arith.constant 0 : i32
    return %c0_i32, %c0_i32_0 : i32, i32
  }
  func.func @transform_4(%arg0: i32) -> (i32, i32) {
    %c0_i32 = arith.constant 0 : i32
    %c0_i32_0 = arith.constant 0 : i32
    %c0_i32_1 = arith.constant 0 : i32
    return %c0_i32, %c0_i32_0 : i32, i32
  }
  func.func @transform_5(%arg0: i32) -> (i32, i32) {
    %c0_i32 = arith.constant 0 : i32
    %c0_i32_0 = arith.constant 0 : i32
    %c0_i32_1 = arith.constant 0 : i32
    return %c0_i32, %c0_i32_0 : i32, i32
  }
  func.func @transform_6(%arg0: i32) -> (i32, i32, i32) {
    %c0_i32 = arith.constant 0 : i32
    %c0_i32_0 = arith.constant 0 : i32
    %c0_i32_1 = arith.constant 0 : i32
    return %arg0, %c0_i32, %c0_i32_0 : i32, i32, i32
  }
}

</mosaic_0001>

<llo_original>
// kernel: tpu_custom_call.1
$region0: #{tpu_custom_call.1}
  #allocation0 [shape = 'u32[]', space=smem, size = 0x4, offset = 0x4, fixed_abs, tag = 'smem constant byte address 0x4 - core index']
  #allocation1 [shape = 'u32[72,128]{1,0:T(1,128)}', space=vmem, size = 0x9000, scoped, tag = 'internal scratch']
  %s0 = inlined_call_operand.hbm [shape: f32[2,4,256], index: 0, kind: input, shape index: {}]
  %s1 = inlined_call_operand.hbm [shape: f32[9,256], index: 1, kind: input, shape index: {}]
  %s2 = inlined_call_operand.vmem [shape: f32[2,36], index: 2, kind: input, shape index: {}]
  %s3 = inlined_call_operand.vmem [shape: f32[2,1], index: 3, kind: input, shape index: {}]
  %s4 = inlined_call_operand.vmem [shape: f32[4,18], index: 4, kind: input, shape index: {}]
  %s5 = inlined_call_operand.vmem [shape: f32[4,1], index: 5, kind: input, shape index: {}]
  %s6 = inlined_call_operand.hbm [shape: f32[2,4,256], index: 6, kind: output, shape index: {}]
  %s7 = sld [smem:[#allocation0]]
  $region65: #{tpu_custom_call.1} parent=0
    _
  %s9 = ssub.s32 1, %s7
  %s10 = scalar_select 0, %s9, %s7
  $region1: #{tpu_custom_call.1} parent=0
    #allocation2 [shape = 'u8[8192]{0}', space=vmem, size = 0x2000, scoped, tag = 'input window, operand 0']
    #allocation3 [shape = 's32[2]{0}', space=sflag, size = 0x8, scoped, tag = 'scoped memory for tpu_custom_call.1']
    #allocation4 [shape = 's32[2]{0}', space=sflag, size = 0x8, scoped, tag = 'scoped memory for tpu_custom_call.1']
    #allocation5 [shape = 'u8[16384]{0}', space=vmem, size = 0x4000, scoped, tag = 'input window, operand 1, single buffered']
    #allocation6 [shape = 's32[1]{0}', space=sflag, size = 0x4, scoped, tag = 'scoped memory for tpu_custom_call.1']
    #allocation7 [shape = 'u8[8192]{0}', space=vmem, size = 0x2000, scoped, tag = 'output window, operand 0']
    %11 = vsyncpa [#allocation3], 0
    %s12 = scalar_lea.sflag [#allocation3], 1
    %13 = vsyncpa %s12, 0
    %14 = vsyncpa [#allocation6], 0
    %15 = vsyncpa [#allocation4], 0
    %s16 = scalar_lea.sflag [#allocation4], 1
    %17 = vsyncpa %s16, 0
    loop: start=0, step=1, limit=4
    $region2: #{tpu_custom_call.1} parent=1 // loop_pre_header
      _
    $region3: #{tpu_custom_call.1} parent=1 // loop_header
      %s19 = sphi 0, %s23
      %p20 = scmp.ge.s32.totalorder %s19, 4
      %s29 = sphi 0, %s31
      %s32 = sphi 0, %s29
      %s33 = sphi 0, %s32
      %s49 = sphi 0, %s33
      %s53 = sphi 0, %s53
      %s55 = sphi 0, %s53
      %s56 = sphi 0, %s55
      %s70 = sphi 0, %s56
      %s74 = sphi 0, %s74
      %s76 = sphi 0, %s74
      %s77 = sphi 0, %s76
      %s91 = sphi 0, %s77
      %s95 = sphi 0, %s95
      %s97 = sphi 0, %s95
      %s98 = sphi 0, %s97
      %s112 = sphi 0, %s98
      %s116 = sphi 0, %s116
      %s118 = sphi 0, %s116
      %s119 = sphi 0, %s118
      %s133 = sphi 0, %s119
      %s137 = sphi 0, %s137
      %s139 = sphi 0, %s137
      %s140 = sphi 0, %s139
      %s154 = sphi 0, %s140
      %s160 = sphi 0, %s162
      %s163 = sphi 0, %s160
      %s164 = sphi 0, %s163
      %s180 = sphi 0, %s164
    $region4: #{tpu_custom_call.1} parent=1 // loop_header_branch
      %22 = sbr.rel (%p20) target = $region8
    $region5: #{tpu_custom_call.1} parent=1 // loop_body
      %s24 = ssub.s32 %s19, 1
      %s25 = ssub.s32 %s19, 2
      %s26 = sadd.s32 %s19, 1
      %s27 = ssub.s32 %s19, %s26
      %p28 = scmp.eq.s32.totalorder %s27, 0
      %s30 = sadd.s32 %s29, 1
      %s31 = scalar_select %p28, %s29, %s30
      %p34 = pneg %p28
      %p35 = scmp.eq.s32.totalorder %s19, 1
      %p36 = por %p34, %p35
      %p37 = scmp.ne.s32.totalorder %s29, %s32
      %p38 = scmp.eq.s32.totalorder %s19, 0
      %p39 = por %p37, %p38
      %p40 = scmp.ne.s32.totalorder %s29, %s32
      %p41 = scmp.eq.s32.totalorder %s24, 1
      %p42 = por %p40, %p41
      %p43 = scmp.ne.s32.totalorder %s32, %s33
      %p44 = scmp.eq.s32.totalorder %s24, 0
      %p45 = por %p43, %p44
      %p46 = scmp.ne.s32.totalorder %s32, %s33
      %p47 = scmp.eq.s32.totalorder %s25, 1
      %p48 = por %p46, %p47
      %p50 = scmp.ne.s32.totalorder %s33, %s49
      %p51 = scmp.eq.s32.totalorder %s25, 0
      %p52 = por %p50, %p51
      %s54 = sadd.s32 %s53, 1
      %p57 = scmp.eq.s32.totalorder %s19, 1
      %p58 = scmp.ne.s32.totalorder %s53, %s55
      %p59 = scmp.eq.s32.totalorder %s19, 0
      %p60 = por %p58, %p59
      %p61 = scmp.ne.s32.totalorder %s53, %s55
      %p62 = scmp.eq.s32.totalorder %s24, 1
      %p63 = por %p61, %p62
      %p64 = scmp.ne.s32.totalorder %s55, %s56
      %p65 = scmp.eq.s32.totalorder %s24, 0
      %p66 = por %p64, %p65
      %p67 = scmp.ne.s32.totalorder %s55, %s56
      %p68 = scmp.eq.s32.totalorder %s25, 1
      %p69 = por %p67, %p68
      %p71 = scmp.ne.s32.totalorder %s56, %s70
      %p72 = scmp.eq.s32.totalorder %s25, 0
      %p73 = por %p71, %p72
      %s75 = sadd.s32 %s74, 1
      %p78 = scmp.eq.s32.totalorder %s19, 1
      %p79 = scmp.ne.s32.totalorder %s74, %s76
      %p80 = scmp.eq.s32.totalorder %s19, 0
      %p81 = por %p79, %p80
      %p82 = scmp.ne.s32.totalorder %s74, %s76
      %p83 = scmp.eq.s32.totalorder %s24, 1
      %p84 = por %p82, %p83
      %p85 = scmp.ne.s32.totalorder %s76, %s77
      %p86 = scmp.eq.s32.totalorder %s24, 0
      %p87 = por %p85, %p86
      %p88 = scmp.ne.s32.totalorder %s76, %s77
      %p89 = scmp.eq.s32.totalorder %s25, 1
      %p90 = por %p88, %p89
      %p92 = scmp.ne.s32.totalorder %s77, %s91
      %p93 = scmp.eq.s32.totalorder %s25, 0
      %p94 = por %p92, %p93
      %s96 = sadd.s32 %s95, 1
      %p99 = scmp.eq.s32.totalorder %s19, 1
      %p100 = scmp.ne.s32.totalorder %s95, %s97
      %p101 = scmp.eq.s32.totalorder %s19, 0
      %p102 = por %p100, %p101
      %p103 = scmp.ne.s32.totalorder %s95, %s97
      %p104 = scmp.eq.s32.totalorder %s24, 1
      %p105 = por %p103, %p104
      %p106 = scmp.ne.s32.totalorder %s97, %s98
      %p107 = scmp.eq.s32.totalorder %s24, 0
      %p108 = por %p106, %p107
      %p109 = scmp.ne.s32.totalorder %s97, %s98
      %p110 = scmp.eq.s32.totalorder %s25, 1
      %p111 = por %p109, %p110
      %p113 = scmp.ne.s32.totalorder %s98, %s112
      %p114 = scmp.eq.s32.totalorder %s25, 0
      %p115 = por %p113, %p114
      %s117 = sadd.s32 %s116, 1
      %p120 = scmp.eq.s32.totalorder %s19, 1
      %p121 = scmp.ne.s32.totalorder %s116, %s118
      %p122 = scmp.eq.s32.totalorder %s19, 0
      %p123 = por %p121, %p122
      %p124 = scmp.ne.s32.totalorder %s116, %s118
      %p125 = scmp.eq.s32.totalorder %s24, 1
      %p126 = por %p124, %p125
      %p127 = scmp.ne.s32.totalorder %s118, %s119
      %p128 = scmp.eq.s32.totalorder %s24, 0
      %p129 = por %p127, %p128
      %p130 = scmp.ne.s32.totalorder %s118, %s119
      %p131 = scmp.eq.s32.totalorder %s25, 1
      %p132 = por %p130, %p131
      %p134 = scmp.ne.s32.totalorder %s119, %s133
      %p135 = scmp.eq.s32.totalorder %s25, 0
      %p136 = por %p134, %p135
      %s138 = sadd.s32 %s137, 1
      %p141 = scmp.eq.s32.totalorder %s19, 1
      %p142 = scmp.ne.s32.totalorder %s137, %s139
      %p143 = scmp.eq.s32.totalorder %s19, 0
      %p144 = por %p142, %p143
      %p145 = scmp.ne.s32.totalorder %s137, %s139
      %p146 = scmp.eq.s32.totalorder %s24, 1
      %p147 = por %p145, %p146
      %p148 = scmp.ne.s32.totalorder %s139, %s140
      %p149 = scmp.eq.s32.totalorder %s24, 0
      %p150 = por %p148, %p149
      %p151 = scmp.ne.s32.totalorder %s139, %s140
      %p152 = scmp.eq.s32.totalorder %s25, 1
      %p153 = por %p151, %p152
      %p155 = scmp.ne.s32.totalorder %s140, %s154
      %p156 = scmp.eq.s32.totalorder %s25, 0
      %p157 = por %p155, %p156
      %s158 = ssub.s32 %s19, %s26
      %p159 = scmp.eq.s32.totalorder %s158, 0
      %s161 = sadd.s32 %s160, 1
      %s162 = scalar_select %p159, %s160, %s161
      %p165 = pneg %p159
      %p166 = scmp.eq.s32.totalorder %s19, 1
      %p167 = por %p165, %p166
      %p168 = scmp.ne.s32.totalorder %s160, %s163
      %p169 = scmp.eq.s32.totalorder %s19, 0
      %p170 = por %p168, %p169
      %p171 = scmp.ne.s32.totalorder %s160, %s163
      %p172 = scmp.eq.s32.totalorder %s24, 1
      %p173 = por %p171, %p172
      %p174 = scmp.ne.s32.totalorder %s163, %s164
      %p175 = scmp.eq.s32.totalorder %s24, 0
      %p176 = por %p174, %p175
      %p177 = scmp.ne.s32.totalorder %s163, %s164
      %p178 = scmp.eq.s32.totalorder %s25, 1
      %p179 = por %p177, %p178
      %p181 = scmp.ne.s32.totalorder %s164, %s180
      %p182 = scmp.eq.s32.totalorder %s25, 0
      %p183 = por %p181, %p182
      %p184 = scmp.le.s32.totalorder 1, %s19
      %p185 = scmp.lt.s32.totalorder %s19, 3
      %p186 = pnand %p184, %p185
      %p187 = pneg %p186
      // Predicated region
      $region9: #{tpu_custom_call.1} parent=5 // pred_check
        _
      $region10: #{tpu_custom_call.1} parent=5 // pred_check_branch
        %189 = sbr.rel (%p186) target = $region12
      $region11: #{tpu_custom_call.1} parent=5 // pred_region
        %s190 = ssub.s32 %s19, 1
        // Predicated region
        $region13: #{tpu_custom_call.1} parent=11 // pred_check
          %p191 = pneg %p66
        $region14: #{tpu_custom_call.1} parent=11 // pred_check_branch
          %193 = sbr.rel (%p191) target = $region16
        $region15: #{tpu_custom_call.1} parent=11 // pred_region
          %195 = vsyncadd [#allocation6], 0
          %s196 = sshll.u32 %s1, 4
          %s197 = int_to_ptr.hbm [resolvable:$true] %s196
          %s198 = sshll.u32 [#allocation5], 4
          %s199 = int_to_ptr.vmem [resolvable:$true] %s198
          %204 = dma.hbm_to_vmem [thread:$0]  %s197, 512, %s199, [#allocation6], 256, 256, 16
        $region16: #{tpu_custom_call.1} parent=11 // pred_fallthru
          _
        // Predicated region
        $region17: #{tpu_custom_call.1} parent=11 // pred_check
          %p205 = pneg %p87
        $region18: #{tpu_custom_call.1} parent=11 // pred_check_branch
          %207 = sbr.rel (%p205) target = $region20
        $region19: #{tpu_custom_call.1} parent=11 // pred_region
          _
        $region20: #{tpu_custom_call.1} parent=11 // pred_fallthru
          _
        // Predicated region
        $region21: #{tpu_custom_call.1} parent=11 // pred_check
          %p208 = pneg %p108
        $region22: #{tpu_custom_call.1} parent=11 // pred_check_branch
          %210 = sbr.rel (%p208) target = $region24
        $region23: #{tpu_custom_call.1} parent=11 // pred_region
          _
        $region24: #{tpu_custom_call.1} parent=11 // pred_fallthru
          _
        // Predicated region
        $region25: #{tpu_custom_call.1} parent=11 // pred_check
          %p211 = pneg %p129
        $region26: #{tpu_custom_call.1} parent=11 // pred_check_branch
          %213 = sbr.rel (%p211) target = $region28
        $region27: #{tpu_custom_call.1} parent=11 // pred_region
          _
        $region28: #{tpu_custom_call.1} parent=11 // pred_fallthru
          _
        // Predicated region
        $region29: #{tpu_custom_call.1} parent=11 // pred_check
          %p214 = pneg %p150
        $region30: #{tpu_custom_call.1} parent=11 // pred_check_branch
          %216 = sbr.rel (%p214) target = $region32
        $region31: #{tpu_custom_call.1} parent=11 // pred_region
          _
        $region32: #{tpu_custom_call.1} parent=11 // pred_fallthru
          _
      $region12: #{tpu_custom_call.1} parent=5 // pred_fallthru
        _
      %p217 = scmp.lt.s32.totalorder %s19, 2
      // Predicated region
      $region33: #{tpu_custom_call.1} parent=5 // pred_check
        %p218 = pneg %p217
      $region34: #{tpu_custom_call.1} parent=5 // pred_check_branch
        %220 = sbr.rel (%p218) target = $region36
      $region35: #{tpu_custom_call.1} parent=5 // pred_region
        // Predicated region
        $region37: #{tpu_custom_call.1} parent=35 // pred_check
          %p221 = pneg %p39
        $region38: #{tpu_custom_call.1} parent=35 // pred_check_branch
          %223 = sbr.rel (%p221) target = $region40
        $region39: #{tpu_custom_call.1} parent=35 // pred_region
          %s224 = sand.u32 %s29, 1
          %s225 = scalar_lea.sflag [#allocation3], %s224
          %s226 = sand.u32 %s29, 1
          %s227 = smul.addr %s226, 8
          %s228 = scalar_lea.vmem [#allocation2], %s227
          %230 = vsyncadd %s225, 0
          %s231 = smul.addr %s19, 2
          %s232 = smul.addr %s231, 4
          %s233 = scalar_lea.hbm %s0, %s232
          %s235 = sshll.u32 %s233, 4
          %s236 = int_to_ptr.hbm [resolvable:$true] %s235
          %s237 = sshll.u32 %s228, 4
          %s238 = int_to_ptr.vmem [resolvable:$true] %s237
          %240 = dma.hbm_to_vmem [thread:$0]  %s236, 128, %s238, %s225
        $region40: #{tpu_custom_call.1} parent=35 // pred_fallthru
          _
      $region36: #{tpu_custom_call.1} parent=5 // pred_fallthru
        _
      %p241 = scmp.le.s32.totalorder 1, %s19
      %p242 = scmp.lt.s32.totalorder %s19, 3
      %p243 = pnand %p241, %p242
      %p244 = pneg %p243
      // Predicated region
      $region41: #{tpu_custom_call.1} parent=5 // pred_check
        _
      $region42: #{tpu_custom_call.1} parent=5 // pred_check_branch
        %246 = sbr.rel (%p243) target = $region44
      $region43: #{tpu_custom_call.1} parent=5 // pred_region
        %s247 = ssub.s32 %s19, 1
        %s248 = sand.u32 %s32, 1
        %s249 = scalar_lea.sflag [#allocation3], %s248
        %s250 = sand.u32 %s32, 1
        %s251 = smul.addr %s250, 8
        %s252 = scalar_lea.vmem [#allocation2], %s251
        // Predicated region
        $region45: #{tpu_custom_call.1} parent=43 // pred_check
          %p253 = pneg %p45
        $region46: #{tpu_custom_call.1} parent=43 // pred_check_branch
          %255 = sbr.rel (%p253) target = $region48
        $region47: #{tpu_custom_call.1} parent=43 // pred_region
          %257 = dma.done %s249, 128
        $region48: #{tpu_custom_call.1} parent=43 // pred_fallthru
          _
        // Predicated region
        $region49: #{tpu_custom_call.1} parent=43 // pred_check
          %p258 = pneg %p66
        $region50: #{tpu_custom_call.1} parent=43 // pred_check_branch
          %260 = sbr.rel (%p258) target = $region52
        $region51: #{tpu_custom_call.1} parent=43 // pred_region
          %262 = dma.done [#allocation6], 512
        $region52: #{tpu_custom_call.1} parent=43 // pred_fallthru
          _
        %s263 = sand.u32 %s32, 1
        %s264 = scalar_lea.sflag [#allocation3], %s263
        %s265 = sand.u32 %s32, 1
        %s266 = smul.addr %s265, 8
        %s267 = scalar_lea.vmem [#allocation2], %s266
        %p268 = pneg %p45
        %p269 = pneg %p42
        %p270 = pneg %p66
        %p271 = pneg %p63
        %p272 = pneg %p87
        %p273 = pneg %p84
        %p274 = pneg %p108
        %p275 = pneg %p105
        %p276 = pneg %p129
        %p277 = pneg %p126
        %p278 = pneg %p150
        %p279 = pneg %p147
        %p280 = pneg %p176
        %p281 = pneg %p173
        %s282 = sand.u32 %s163, 1
        %s283 = scalar_lea.sflag [#allocation4], %s282
        %s284 = sand.u32 %s163, 1
        %s285 = smul.addr %s284, 8
        %s286 = scalar_lea.vmem [#allocation7], %s285
        %v287 = vld [vmem:[#allocation5] sm:$0xff]
        %v288 = vld [vmem:[#allocation5 + $0x8] sm:$0xff]
        %v289 = vld [vmem:[#allocation5 + $0x10] sm:$0x1]
        %v290 = vld [vmem:[#allocation5 + $0x18] sm:$0x1]
        %v291 = vld [vmem:[%s2] sm:$0x3]
        %v292 = vld [vmem:[%s4] sm:$0xf]
        %v293 = vld [vmem:[%s3] sm:$0x3]
        %v294 = vld [vmem:[%s5] sm:$0xf]
        %v295 = vld [vmem:[%s252] sm:$0xff]
        %297 = vst [vmem:[#allocation1] ss:$2 sm:$0xff] %v295
        %v298 = vld.sshfl [vmem:[#allocation1] sm:$0xff pattern:$0x75316420]
        %v299 = vld.sshfl [vmem:[#allocation1 + $0x8] sm:$0xff pattern:$0x75316420]
        %302 = vrot.lane.b32.xlu0 %v298, 17
        %v303 = vpop.permute.xlu0 %302
        %304 = vrot.lane.b32.xlu0 %v299, 17
        %v305 = vpop.permute.xlu0 %304
        %v306 = vlaneseq
        %v307 = vand.u32 %v306, 127
        %vm308 = vcmp.lt.s32.totalorder %v307, 17
        %v309 = vsel %vm308, %v303, %v305
        %v310 = vsel %vm308, %v305, %v303
        %v311 = vperm.slane %v287, 0
        %v312 = vperm.slane %v288, 0
        %v313 = vmul.f32 %v310, %v311
        %v314 = vmul.f32 %v309, %v312
        %315 = vst [vmem:[#allocation1] ss:$2 sm:$0xff] %v295
        %v316 = vld.sshfl [vmem:[#allocation1] sm:$0xff pattern:$0x75316420]
        %v317 = vld.sshfl [vmem:[#allocation1 + $0x8] sm:$0xff pattern:$0x75316420]
        %320 = vrot.lane.b32.xlu0 %v316, 16
        %v321 = vpop.permute.xlu0 %320
        %322 = vrot.lane.b32.xlu0 %v317, 16
        %v323 = vpop.permute.xlu0 %322
        %vm324 = vcmp.lt.s32.totalorder %v307, 16
        %v325 = vsel %vm324, %v321, %v323
        %v326 = vsel %vm324, %v323, %v321
        %v327 = vperm.slane %v287, 1
        %v328 = vperm.slane %v288, 1
        %v329 = vmul.f32 %v326, %v327
        %v330 = vmul.f32 %v325, %v328
        %331 = vst [vmem:[#allocation1] ss:$2 sm:$0xff] %v295
        %v332 = vld.sshfl [vmem:[#allocation1] sm:$0xff pattern:$0x75316420]
        %v333 = vld.sshfl [vmem:[#allocation1 + $0x8] sm:$0xff pattern:$0x75316420]
        %336 = vrot.lane.b32.xlu0 %v332, 15
        %v337 = vpop.permute.xlu0 %336
        %338 = vrot.lane.b32.xlu0 %v333, 15
        %v339 = vpop.permute.xlu0 %338
        %vm340 = vcmp.lt.s32.totalorder %v307, 15
        %v341 = vsel %vm340, %v337, %v339
        %v342 = vsel %vm340, %v339, %v337
        %v343 = vperm.slane %v287, 2
        %v344 = vperm.slane %v288, 2
        %v345 = vmul.f32 %v342, %v343
        %v346 = vmul.f32 %v341, %v344
        %347 = vst [vmem:[#allocation1] ss:$2 sm:$0xff] %v295
        %v348 = vld.sshfl [vmem:[#allocation1] sm:$0xff pattern:$0x75316420]
        %v349 = vld.sshfl [vmem:[#allocation1 + $0x8] sm:$0xff pattern:$0x75316420]
        %352 = vrot.lane.b32.xlu0 %v348, 1
        %v353 = vpop.permute.xlu0 %352
        %354 = vrot.lane.b32.xlu0 %v349, 1
        %v355 = vpop.permute.xlu0 %354
        %vm356 = vcmp.lt.s32.totalorder %v307, 1
        %v357 = vsel %vm356, %v353, %v355
        %v358 = vsel %vm356, %v355, %v353
        %v359 = vperm.slane %v287, 3
        %v360 = vperm.slane %v288, 3
        %v361 = vmul.f32 %v358, %v359
        %v362 = vmul.f32 %v357, %v360
        %363 = vst [vmem:[#allocation1] ss:$2 sm:$0xff] %v295
        %v364 = vld.sshfl [vmem:[#allocation1] sm:$0xff pattern:$0x75316420]
        %v365 = vld.sshfl [vmem:[#allocation1 + $0x8] sm:$0xff pattern:$0x75316420]
        %368 = vrot.lane.b32.xlu0 %v364, 127
        %v369 = vpop.permute.xlu0 %368
        %370 = vrot.lane.b32.xlu0 %v365, 127
        %v371 = vpop.permute.xlu0 %370
        %vm372 = vcmp.lt.s32.totalorder %v307, 127
        %v373 = vsel %vm372, %v369, %v371
        %v374 = vsel %vm372, %v371, %v369
        %v375 = vperm.slane %v287, 5
        %v376 = vperm.slane %v288, 5
        %v377 = vmul.f32 %v373, %v375
        %v378 = vmul.f32 %v374, %v376
        %379 = vst [vmem:[#allocation1] ss:$2 sm:$0xff] %v295
        %v380 = vld.sshfl [vmem:[#allocation1] sm:$0xff pattern:$0x75316420]
        %v381 = vld.sshfl [vmem:[#allocation1 + $0x8] sm:$0xff pattern:$0x75316420]
        %384 = vrot.lane.b32.xlu0 %v380, 113
        %v385 = vpop.permute.xlu0 %384
        %386 = vrot.lane.b32.xlu0 %v381, 113
        %v387 = vpop.permute.xlu0 %386
        %vm388 = vcmp.lt.s32.totalorder %v307, 113
        %v389 = vsel %vm388, %v385, %v387
        %v390 = vsel %vm388, %v387, %v385
        %v391 = vperm.slane %v287, 6
        %v392 = vperm.slane %v288, 6
        %v393 = vmul.f32 %v389, %v391
        %v394 = vmul.f32 %v390, %v392
        %395 = vst [vmem:[#allocation1] ss:$2 sm:$0xff] %v295
        %v396 = vld.sshfl [vmem:[#allocation1] sm:$0xff pattern:$0x75316420]
        %v397 = vld.sshfl [vmem:[#allocation1 + $0x8] sm:$0xff pattern:$0x75316420]
        %400 = vrot.lane.b32.xlu0 %v396, 112
        %v401 = vpop.permute.xlu0 %400
        %402 = vrot.lane.b32.xlu0 %v397, 112
        %v403 = vpop.permute.xlu0 %402
        %vm404 = vcmp.lt.s32.totalorder %v307, 112
        %v405 = vsel %vm404, %v401, %v403
        %v406 = vsel %vm404, %v403, %v401
        %v407 = vperm.slane %v287, 7
        %v408 = vperm.slane %v288, 7
        %v409 = vmul.f32 %v405, %v407
        %v410 = vmul.f32 %v406, %v408
        %411 = vst [vmem:[#allocation1] ss:$2 sm:$0xff] %v295
        %v412 = vld.sshfl [vmem:[#allocation1] sm:$0xff pattern:$0x75316420]
        %v413 = vld.sshfl [vmem:[#allocation1 + $0x8] sm:$0xff pattern:$0x75316420]
        %416 = vrot.lane.b32.xlu0 %v412, 111
        %v417 = vpop.permute.xlu0 %416
        %418 = vrot.lane.b32.xlu0 %v413, 111
        %v419 = vpop.permute.xlu0 %418
        %vm420 = vcmp.lt.s32.totalorder %v307, 111
        %v421 = vsel %vm420, %v417, %v419
        %v422 = vsel %vm420, %v419, %v417
        %v423 = vperm.slane %v289, 0
        %v424 = vperm.slane %v290, 0
        %v425 = vmul.f32 %v421, %v423
        %v426 = vmul.f32 %v422, %v424
        %v429 = vrot.slane %v329, 4
        %v430 = vrot.slane %v330, 4
        %v435 = vrot.slane %v361, 4
        %v436 = vrot.slane %v362, 4
        %439 = vst [vmem:[#allocation1] ss:$2 sm:$0xff] %v295
        %v440 = vld.sshfl [vmem:[#allocation1] sm:$0xff pattern:$0x75316420]
        %v441 = vld.sshfl [vmem:[#allocation1 + $0x8] sm:$0xff pattern:$0x75316420]
        %v446 = vrot.slane %v377, 4
        %v447 = vrot.slane %v378, 4
        %v452 = vrot.slane %v409, 4
        %v453 = vrot.slane %v410, 4
        %vm456 = vcmask 1043456
        %v457 = vsel %vm456, %v313, %v429
        %v458 = vsel %vm456, %v314, %v430
        %v459 = vsel %vm456, %v345, %v435
        %v460 = vsel %vm456, %v346, %v436
        %v461 = vsel %vm456, %v440, %v446
        %v462 = vsel %vm456, %v441, %v447
        %v463 = vsel %vm456, %v393, %v452
        %v464 = vsel %vm456, %v394, %v453
        %466 = vset.pattern.permute.xlu0 0
        %467 = vperm.xlu0 %466, %v293
        %v468 = vpop.permute.xlu0 %467
        %vm470 = vcmask 293888
        %v472 = vsel %vm470, %v291, 0
        %v475 = vsel %vm456, %v425, 0
        %v478 = vsel %vm456, %v426, 0
        %480 = vmatpush.msra.mxu0 0.0
        %481 = vmatpush.msra.mxu0 0.0
        %482 = vmatpush.msra.mxu0 0.0
        %483 = vmatpush.msra.mxu0 0.0
        %484 = vmatpush.msra.mxu0 0.0
        %485 = vmatpush.msra.mxu0 0.0
        %486 = vmatpush.msra.mxu0 0.0
        %487 = vmatpush.msra.mxu0 0.0
        %488 = vmatpush.msra.mxu0 0.0
        %489 = vmatpush.msra.mxu0 0.0
        %490 = vmatpush.msra.mxu0 0.0
        %491 = vmatpush.msra.mxu0 %v475
        %492 = vmatpush.msra.mxu0 %v463
        %493 = vmatpush.msra.mxu0 %v461
        %494 = vmatpush.msra.mxu0 %v459
        %495 = vmatpush.msra.mxu0 %v457
        %496 = vmatmul.f32.gmra.mxu0 %v472
        %v497 = vpop.f32.mrf.mxu0
        %v498 = vadd.f32 %v468, %v497
        %499 = vdwg.mxu0
        %500 = vmatpush.msra.mxu0 0.0
        %501 = vmatpush.msra.mxu0 0.0
        %502 = vmatpush.msra.mxu0 0.0
        %503 = vmatpush.msra.mxu0 0.0
        %504 = vmatpush.msra.mxu0 0.0
        %505 = vmatpush.msra.mxu0 0.0
        %506 = vmatpush.msra.mxu0 0.0
        %507 = vmatpush.msra.mxu0 0.0
        %508 = vmatpush.msra.mxu0 0.0
        %509 = vmatpush.msra.mxu0 0.0
        %510 = vmatpush.msra.mxu0 0.0
        %511 = vmatpush.msra.mxu0 %v478
        %512 = vmatpush.msra.mxu0 %v464
        %513 = vmatpush.msra.mxu0 %v462
        %514 = vmatpush.msra.mxu0 %v460
        %515 = vmatpush.msra.mxu0 %v458
        %516 = vmatmul.f32.gmra.mxu0 %v472
        %v517 = vpop.f32.mrf.mxu0
        %v518 = vadd.f32 %v468, %v517
        %519 = vdwg.mxu0
        %v520 = vmul.f32 %v498, 0.01
        %v521 = vmul.f32 %v518, 0.01
        %v522 = vmax.f32 %v498, %v520
        %v523 = vmax.f32 %v518, %v521
        %524 = vrot.lane.b32.xlu0 %v522, 17
        %v525 = vpop.permute.xlu0 %524
        %526 = vrot.lane.b32.xlu0 %v523, 17
        %v527 = vpop.permute.xlu0 %526
        %v528 = vsel %vm308, %v525, %v527
        %v529 = vsel %vm308, %v527, %v525
        %v530 = vmul.f32 %v529, %v311
        %v531 = vmul.f32 %v528, %v312
        %532 = vrot.lane.b32.xlu0 %v522, 16
        %v533 = vpop.permute.xlu0 %532
        %534 = vrot.lane.b32.xlu0 %v523, 16
        %v535 = vpop.permute.xlu0 %534
        %v536 = vsel %vm324, %v533, %v535
        %v537 = vsel %vm324, %v535, %v533
        %v538 = vmul.f32 %v537, %v327
        %v539 = vmul.f32 %v536, %v328
        %540 = vrot.lane.b32.xlu0 %v522, 15
        %v541 = vpop.permute.xlu0 %540
        %542 = vrot.lane.b32.xlu0 %v523, 15
        %v543 = vpop.permute.xlu0 %542
        %v544 = vsel %vm340, %v541, %v543
        %v545 = vsel %vm340, %v543, %v541
        %v546 = vmul.f32 %v545, %v343
        %v547 = vmul.f32 %v544, %v344
        %548 = vrot.lane.b32.xlu0 %v522, 1
        %v549 = vpop.permute.xlu0 %548
        %550 = vrot.lane.b32.xlu0 %v523, 1
        %v551 = vpop.permute.xlu0 %550
        %v552 = vsel %vm356, %v549, %v551
        %v553 = vsel %vm356, %v551, %v549
        %v554 = vmul.f32 %v553, %v359
        %v555 = vmul.f32 %v552, %v360
        %556 = vrot.lane.b32.xlu0 %v522, 127
        %v557 = vpop.permute.xlu0 %556
        %558 = vrot.lane.b32.xlu0 %v523, 127
        %v559 = vpop.permute.xlu0 %558
        %v560 = vsel %vm372, %v557, %v559
        %v561 = vsel %vm372, %v559, %v557
        %v562 = vmul.f32 %v560, %v375
        %v563 = vmul.f32 %v561, %v376
        %564 = vrot.lane.b32.xlu0 %v522, 113
        %v565 = vpop.permute.xlu0 %564
        %566 = vrot.lane.b32.xlu0 %v523, 113
        %v567 = vpop.permute.xlu0 %566
        %v568 = vsel %vm388, %v565, %v567
        %v569 = vsel %vm388, %v567, %v565
        %v570 = vmul.f32 %v568, %v391
        %v571 = vmul.f32 %v569, %v392
        %572 = vrot.lane.b32.xlu0 %v522, 112
        %v573 = vpop.permute.xlu0 %572
        %574 = vrot.lane.b32.xlu0 %v523, 112
        %v575 = vpop.permute.xlu0 %574
        %v576 = vsel %vm404, %v573, %v575
        %v577 = vsel %vm404, %v575, %v573
        %v578 = vmul.f32 %v576, %v407
        %v579 = vmul.f32 %v577, %v408
        %580 = vrot.lane.b32.xlu0 %v522, 111
        %v581 = vpop.permute.xlu0 %580
        %582 = vrot.lane.b32.xlu0 %v523, 111
        %v583 = vpop.permute.xlu0 %582
        %v584 = vsel %vm420, %v581, %v583
        %v585 = vsel %vm420, %v583, %v581
        %v586 = vmul.f32 %v584, %v423
        %v587 = vmul.f32 %v585, %v424
        %v590 = vrot.slane %v538, 6
        %v591 = vrot.slane %v539, 6
        %v596 = vrot.slane %v546, 4
        %v597 = vrot.slane %v547, 4
        %v602 = vrot.slane %v554, 2
        %v603 = vrot.slane %v555, 2
        %v608 = vrot.slane %v562, 6
        %v609 = vrot.slane %v563, 6
        %v614 = vrot.slane %v570, 4
        %v615 = vrot.slane %v571, 4
        %v620 = vrot.slane %v578, 2
        %v621 = vrot.slane %v579, 2
        %vm624 = vcmask 1041408
        %v625 = vsel %vm624, %v530, %v590
        %v626 = vsel %vm624, %v531, %v591
        %v627 = vsel %vm456, %v625, %v596
        %v628 = vsel %vm456, %v626, %v597
        %vm629 = vcmask 1045504
        %v630 = vsel %vm629, %v627, %v602
        %v631 = vsel %vm629, %v628, %v603
        %v632 = vsel %vm624, %v522, %v608
        %v633 = vsel %vm624, %v523, %v609
        %v634 = vsel %vm456, %v632, %v614
        %v635 = vsel %vm456, %v633, %v615
        %v636 = vsel %vm629, %v634, %v620
        %v637 = vsel %vm629, %v635, %v621
        %639 = vset.pattern.permute.xlu0 0
        %640 = vperm.xlu0 %639, %v294
        %v641 = vpop.permute.xlu0 %640
        %vm643 = vcmask 146432
        %v645 = vsel %vm643, %v292, 0
        %v648 = vsel %vm624, %v586, 0
        %v651 = vsel %vm624, %v587, 0
        %653 = vmatpush.msra.mxu0 0.0
        %654 = vmatpush.msra.mxu0 0.0
        %655 = vmatpush.msra.mxu0 0.0
        %656 = vmatpush.msra.mxu0 0.0
        %657 = vmatpush.msra.mxu0 0.0
        %658 = vmatpush.msra.mxu0 0.0
        %659 = vmatpush.msra.mxu0 0.0
        %660 = vmatpush.msra.mxu0 0.0
        %661 = vmatpush.msra.mxu0 0.0
        %662 = vmatpush.msra.mxu0 0.0
        %663 = vmatpush.msra.mxu0 0.0
        %664 = vmatpush.msra.mxu0 0.0
        %665 = vmatpush.msra.mxu0 0.0
        %666 = vmatpush.msra.mxu0 %v648
        %667 = vmatpush.msra.mxu0 %v636
        %668 = vmatpush.msra.mxu0 %v630
        %669 = vmatmul.f32.gmra.mxu0 %v645
        %v670 = vpop.f32.mrf.mxu0
        %v671 = vadd.f32 %v641, %v670
        %672 = vdwg.mxu0
        %673 = vmatpush.msra.mxu0 0.0
        %674 = vmatpush.msra.mxu0 0.0
        %675 = vmatpush.msra.mxu0 0.0
        %676 = vmatpush.msra.mxu0 0.0
        %677 = vmatpush.msra.mxu0 0.0
        %678 = vmatpush.msra.mxu0 0.0
        %679 = vmatpush.msra.mxu0 0.0
        %680 = vmatpush.msra.mxu0 0.0
        %681 = vmatpush.msra.mxu0 0.0
        %682 = vmatpush.msra.mxu0 0.0
        %683 = vmatpush.msra.mxu0 0.0
        %684 = vmatpush.msra.mxu0 0.0
        %685 = vmatpush.msra.mxu0 0.0
        %686 = vmatpush.msra.mxu0 %v651
        %687 = vmatpush.msra.mxu0 %v637
        %688 = vmatpush.msra.mxu0 %v631
        %689 = vmatmul.f32.gmra.mxu0 %v645
        %v690 = vpop.f32.mrf.mxu0
        %v691 = vadd.f32 %v641, %v690
        %692 = vdwg.mxu0
        %v693 = vmul.f32 %v671, 0.01
        %v694 = vmul.f32 %v691, 0.01
        %v695 = vmax.f32 %v671, %v693
        %v696 = vmax.f32 %v691, %v694
        %697 = vst [vmem:[#allocation1] ss:$2 sm:$0xff] %v295
        %v698 = vld.sshfl [vmem:[#allocation1] sm:$0xff pattern:$0x75316420]
        %v699 = vld.sshfl [vmem:[#allocation1 + $0x8] sm:$0xff pattern:$0x75316420]
        %v702 = vadd.f32 %v695, %v698
        %v703 = vadd.f32 %v696, %v699
        %v706 = vrot.slane %v703, 4
        %v707 = vsel %vm456, %v702, %v706
        %709 = vst [vmem:[%s286] sm:$0xff] %v707
        %s710 = sand.u32 %s163, 1
        %s711 = scalar_lea.sflag [#allocation4], %s710
        %s712 = sand.u32 %s163, 1
        %s713 = smul.addr %s712, 8
        %s714 = scalar_lea.vmem [#allocation7], %s713
        // Predicated region
        $region53: #{tpu_custom_call.1} parent=43 // pred_check
          %p715 = pneg %p173
        $region54: #{tpu_custom_call.1} parent=43 // pred_check_branch
          %717 = sbr.rel (%p715) target = $region56
        $region55: #{tpu_custom_call.1} parent=43 // pred_region
          %719 = vsyncadd %s711, 0
          %s720 = smul.addr %s24, 2
          %s721 = smul.addr %s720, 4
          %s722 = scalar_lea.hbm %s6, %s721
          %s724 = sshll.u32 %s714, 4
          %s725 = int_to_ptr.vmem [resolvable:$true] %s724
          %s726 = sshll.u32 %s722, 4
          %s727 = int_to_ptr.hbm [resolvable:$true] %s726
          %729 = dma.vmem_to_hbm [thread:$0]  %s725, 128, %s727, %s711
        $region56: #{tpu_custom_call.1} parent=43 // pred_fallthru
          _
      $region44: #{tpu_custom_call.1} parent=5 // pred_fallthru
        _
      %p730 = scmp.le.s32.totalorder 2, %s19
      // Predicated region
      $region57: #{tpu_custom_call.1} parent=5 // pred_check
        %p731 = pneg %p730
      $region58: #{tpu_custom_call.1} parent=5 // pred_check_branch
        %733 = sbr.rel (%p731) target = $region60
      $region59: #{tpu_custom_call.1} parent=5 // pred_region
        %s734 = ssub.s32 %s19, 2
        // Predicated region
        $region61: #{tpu_custom_call.1} parent=59 // pred_check
          %p735 = pneg %p179
        $region62: #{tpu_custom_call.1} parent=59 // pred_check_branch
          %737 = sbr.rel (%p735) target = $region64
        $region63: #{tpu_custom_call.1} parent=59 // pred_region
          %s738 = sand.u32 %s164, 1
          %s739 = scalar_lea.sflag [#allocation4], %s738
          %s740 = sand.u32 %s164, 1
          %s741 = smul.addr %s740, 8
          %s742 = scalar_lea.vmem [#allocation7], %s741
          %744 = dma.done %s739, 128
        $region64: #{tpu_custom_call.1} parent=59 // pred_fallthru
          _
      $region60: #{tpu_custom_call.1} parent=5 // pred_fallthru
        _
    $region6: #{tpu_custom_call.1} parent=1 // loop_footer
      %s23 = sadd.s32 1, %s19
    $region7: #{tpu_custom_call.1} parent=1 // loop_footer_branch
      %18 = sbr.rel target = $region3
    $region8: #{tpu_custom_call.1} parent=1 // loop_exit
      _
    %745 = vsyncpa [#allocation3], 1
    %s746 = scalar_lea.sflag [#allocation3], 1
    %747 = vsyncpa %s746, 1
    %748 = vsyncpa [#allocation6], 1
    %749 = vsyncpa [#allocation4], 1
    %s750 = scalar_lea.sflag [#allocation4], 1
    %751 = vsyncpa %s750, 1

</llo_original>
